<compile_context>
chip_gen: v7x
topology: tpu7x:2x2x1
jax: 0.10.0
libtpu: 0.0.40
codegen_flags: <defaults>
</compile_context>

<pallas_src>
import jax
import jax.numpy as jnp
from jax.experimental import pallas as pl
from jax.experimental.pallas import tpu as pltpu


def _round_up(x, m):
    return (x + m - 1) // m * m


def _vmem_capacity_bytes():
    """Physical VMEM per core; conservative 64 MiB (v7x) fallback."""
    try:
        info = pltpu.get_tpu_info()
        cap = int(getattr(info, "vmem_capacity_bytes", 0) or 0)
        if cap > 0:
            return cap
    except Exception:
        pass
    return 64 * 1024 * 1024


def _patch_embed_kernel(p_ref, w_ref, b_ref, o_ref):
    # p_ref: (TM, Kp)  w_ref: (Kp, TE)  b_ref: (1, TE)  o_ref: (TM, TE)
    # Module keeps patch embedding in FP32 -> force f32-accurate MXU passes
    # (DEFAULT precision would silently truncate f32 operands to bf16).
    acc = jnp.dot(
        p_ref[...],
        w_ref[...],
        preferred_element_type=jnp.float32,
        precision=jax.lax.Precision.HIGHEST,
    )
    o_ref[...] = (acc + b_ref[...]).astype(o_ref.dtype)


def patch_embedding(x, weight, bias, patch_size, *, tile_m=None, tile_e=None):
    """
    x      : (B, C, H, W) fp32   (NCHW, like PyTorch)
    weight : (E, C, P, P) fp32   (PyTorch Conv2d weight layout)
    bias   : (E,) fp32
    returns: (B, N, E) fp32 with N = (H/P)*(W/P)
    """
    B, C, H, W = x.shape
    E = weight.shape[0]
    P = patch_size
    assert H % P == 0 and W % P == 0
    nh, nw = H // P, W // P
    N = nh * nw
    K = C * P * P
    M = B * N

    # --- patch extraction: (B,C,H,W) -> (M, K) in (C, kh, kw) order ----------
    # (JAX glue adjacent to the pallas_call; see TODO(synk) above.)
    patches = x.reshape(B, C, nh, P, nw, P)
    patches = jnp.transpose(patches, (0, 2, 4, 1, 3, 5)).reshape(M, K)
    patches = patches.astype(jnp.float32)

    # Conv weight (E, C, P, P) -> (K, E) so out = patches @ W + b.
    w_mat = weight.reshape(E, K).T.astype(jnp.float32)
    b_row = bias.reshape(1, E).astype(jnp.float32)

    # --- lane/sublane-friendly sizes (no over-padding of E) -------------------
    K_pad = _round_up(K, 128)            # full K per block (no K grid axis)
    E_pad = _round_up(E, 128)            # never padded beyond this

    # Per-generation VMEM budget.
    vmem_cap = _vmem_capacity_bytes()
    vmem_limit = int(vmem_cap * 0.75)    # ~96 MiB on v5e/v6e, ~48 MiB on v7x
    work_budget = int(vmem_limit * 0.9)  # what we plan the tile working set against
    tile_m_cap = 1024 if vmem_cap >= 100 * 1024 * 1024 else 512

    # --- tile_e: resident weight when it fits, else a divisor of E_pad --------
    # (count 2 buffers per operand to stay under the double-buffer allocation)
    if tile_e is None:
        if 2 * K_pad * E_pad * 4 <= work_budget // 3:
            tile_e = E_pad               # weight VMEM-resident, E grid axis == 1
        else:
            units = E_pad // 128
            best = 1
            for d in range(1, units + 1):
                if units % d == 0 and 2 * K_pad * (128 * d) * 4 <= work_budget // 3:
                    best = d
            tile_e = 128 * best
    else:
        tile_e = max(128, (tile_e // 128) * 128)
        while E_pad % tile_e != 0:       # snap to a divisor -> no over-padding
            tile_e -= 128
        tile_e = max(tile_e, 128)

    # --- tile_m: as big as the remaining VMEM budget allows --------------------
    if tile_m is None:
        remaining = max(0, work_budget - 2 * K_pad * tile_e * 4)
        per_row = 2 * (K_pad + tile_e) * 4     # double-buffered patches + output
        tile_m = max(8, (remaining // max(per_row, 1)) // 8 * 8)
        tile_m = min(tile_m, tile_m_cap)
    tile_m = max(8, (tile_m // 8) * 8)
    tile_m = min(tile_m, _round_up(M, 8))
    M_pad = _round_up(M, tile_m)

    # Keep >= 2 M-tiles when possible so the parallel grid axis can shard
    # across both TensorCores on v7x (near-zero cost on 1-TC chips).
    if M_pad // tile_m < 2 and M > 8:
        tile_m = _round_up(pl.cdiv(M, 2), 8)
        M_pad = _round_up(M, tile_m)

    # --- pad only when actually needed (zero-filled => exact math) ------------
    if (M_pad, K_pad) != (M, K):
        patches = jnp.pad(patches, ((0, M_pad - M), (0, K_pad - K)))
    if (K_pad, E_pad) != (K, E):
        w_mat = jnp.pad(w_mat, ((0, K_pad - K), (0, E_pad - E)))
    if E_pad != E:
        b_row = jnp.pad(b_row, ((0, 0), (0, E_pad - E)))

    grid_m = M_pad // tile_m
    grid_e = E_pad // tile_e
    grid = (grid_m, grid_e)              # E-tile axis innermost

    # patches tile: constant block index across the inner (E) axis -> Pallas
    # skips the redundant re-DMA; with grid_e == 1 the weight index map is
    # constant too -> weight fetched once and held resident in VMEM.
    p_spec = pl.BlockSpec((tile_m, K_pad), lambda i, j: (i, 0))
    if grid_e > 1:
        w_spec = pl.BlockSpec((K_pad, tile_e), lambda i, j: (0, j),
                              pipeline_mode=pl.Buffered(3))
    else:
        w_spec = pl.BlockSpec((K_pad, tile_e), lambda i, j: (0, j))
    b_spec = pl.BlockSpec((1, tile_e), lambda i, j: (0, j))
    o_spec = pl.BlockSpec((tile_m, tile_e), lambda i, j: (i, j))

    out = pl.pallas_call(
        _patch_embed_kernel,
        out_shape=jax.ShapeDtypeStruct((M_pad, E_pad), jnp.float32),
        grid_spec=pltpu.PrefetchScalarGridSpec(
            num_scalar_prefetch=0,
            grid=grid,
            in_specs=[p_spec, w_spec, b_spec],
            out_specs=o_spec,
        ),
        compiler_params=pltpu.CompilerParams(
            dimension_semantics=("parallel", "parallel"),
            vmem_limit_bytes=vmem_limit,
        ),
    )(patches, w_mat, b_row)

    if M_pad != M or E_pad != E:
        out = out[:M, :E]
    return out.reshape(B, N, E)


def _reference(x, weight, bias, patch_size):
    """Pure-JAX reference via lax conv (same math as PyTorch Conv2d, exact f32)."""
    out = jax.lax.conv_general_dilated(
        x.astype(jnp.float32),
        weight.astype(jnp.float32),
        window_strides=(patch_size, patch_size),
        padding="VALID",
        dimension_numbers=("NCHW", "OIHW", "NCHW"),
        precision=jax.lax.Precision.HIGHEST,
    )
    out = out + bias.reshape(1, -1, 1, 1)
    B, E, nh, nw = out.shape
    return out.reshape(B, E, nh * nw).transpose(0, 2, 1)   # (B, N, E)


if __name__ == "__main__":
    # Small shapes consistent with the module: img_size=16, patch_size=4,
    # in_channels=4, embed_dim=32  ->  num_patches = 16, K = 64.
    B, C, H, W = 2, 4, 16, 16
    P, E = 4, 32

    key = jax.random.PRNGKey(0)
    kx, kw, kb = jax.random.split(key, 3)
    x = jax.random.normal(kx, (B, C, H, W), dtype=jnp.float32)
    # Deterministic init mimicking nn.Conv2d default (uniform +/- 1/sqrt(fan_in)).
    fan_in = C * P * P
    bound = 1.0 / (fan_in ** 0.5)
    weight = jax.random.uniform(kw, (E, C, P, P), jnp.float32, -bound, bound)
    bias = jax.random.uniform(kb, (E,), jnp.float32, -bound, bound)

    out = patch_embedding(x, weight, bias, P)
    out = jax.block_until_ready(out)

    ref = _reference(x, weight, bias, P)
    assert out.shape == (B, (H // P) * (W // P), E)
    assert jnp.allclose(out, ref, atol=1e-5, rtol=1e-5)

    print("KERNEL_OK")
</pallas_src>

<mosaic_0001>
module attributes {stable_mosaic.version = 11 : i64} {
  func.func @_patch_embed_kernel(%arg0: i32, %arg1: i32, %arg2: memref<16x128xf32, #tpu.memory_space<vmem>>, %arg3: memref<128x128xf32, #tpu.memory_space<vmem>>, %arg4: memref<1x128xf32, #tpu.memory_space<vmem>>, %arg5: memref<16x128xf32, #tpu.memory_space<vmem>>) attributes {dimension_semantics = [#tpu.dimension_semantics<parallel>, #tpu.dimension_semantics<parallel>], iteration_bounds = array<i64: 2, 1>, scalar_prefetch = 0 : i64, scratch_operands = 0 : i64, tpu.core_type = #tpu.core_type<tc>, window_params = [{transform_indices = @transform_0, window_bounds = array<i64: 16, 128>}, {transform_indices = @transform_1, window_bounds = array<i64: 128, 128>}, {transform_indices = @transform_2, window_bounds = array<i64: 1, 128>}, {transform_indices = @transform_3, window_bounds = array<i64: 16, 128>}]} {
    %c0 = arith.constant 0 : index
    %c0_0 = arith.constant 0 : index
    %0 = vector.load %arg2[%c0, %c0_0] : memref<16x128xf32, #tpu.memory_space<vmem>>, vector<16x128xf32>
    %c0_1 = arith.constant 0 : index
    %c0_2 = arith.constant 0 : index
    %1 = vector.load %arg3[%c0_1, %c0_2] : memref<128x128xf32, #tpu.memory_space<vmem>>, vector<128x128xf32>
    %cst = arith.constant dense<0.000000e+00> : vector<16x128xf32>
    %2 = tpu.matmul %0, %1, %cst {dimension_numbers = #tpu.dot_dimension_numbers<[1], [0], [0], [1], [0, 0, 1, 1], [], []>, precision = #tpu.contract_precision<fp32>} : vector<16x128xf32>, vector<128x128xf32>, vector<16x128xf32> -> vector<16x128xf32>
    %c0_3 = arith.constant 0 : index
    %c0_4 = arith.constant 0 : index
    %3 = vector.load %arg4[%c0_3, %c0_4] : memref<1x128xf32, #tpu.memory_space<vmem>>, vector<1x128xf32>
    %4 = vector.broadcast %3 : vector<1x128xf32> to vector<16x128xf32>
    %5 = arith.addf %2, %4 : vector<16x128xf32>
    %c0_5 = arith.constant 0 : index
    %c0_6 = arith.constant 0 : index
    %6 = vector.load %arg5[%c0_5, %c0_6] : memref<16x128xf32, #tpu.memory_space<vmem>>, vector<16x128xf32>
    tpu.vector_store %arg5[%c0_5, %c0_6], %5 {strides = array<i32>} : memref<16x128xf32, #tpu.memory_space<vmem>>, vector<16x128xf32>,
    return
  }
  func.func @transform_0(%arg0: i32, %arg1: i32) -> (i32, i32) {
    %c0_i32 = arith.constant 0 : i32
    %c0_i32_0 = arith.constant 0 : i32
    return %arg0, %c0_i32 : i32, i32
  }
  func.func @transform_1(%arg0: i32, %arg1: i32) -> (i32, i32) {
    %c0_i32 = arith.constant 0 : i32
    %c0_i32_0 = arith.constant 0 : i32
    return %c0_i32, %arg1 : i32, i32
  }
  func.func @transform_2(%arg0: i32, %arg1: i32) -> (i32, i32) {
    %c0_i32 = arith.constant 0 : i32
    %c0_i32_0 = arith.constant 0 : i32
    return %c0_i32, %arg1 : i32, i32
  }
  func.func @transform_3(%arg0: i32, %arg1: i32) -> (i32, i32) {
    %c0_i32 = arith.constant 0 : i32
    return %arg0, %arg1 : i32, i32
  }
}

</mosaic_0001>

<llo_original>
// kernel: tpu_custom_call.1
$region0: #{tpu_custom_call.1}
  #allocation0 [shape = 'u32[]', space=smem, size = 0x4, offset = 0x4, fixed_abs, tag = 'smem constant byte address 0x4 - core index']
  #allocation1 [shape = 'u32[144,128]{1,0:T(1,128)}', space=vmem, size = 0x12000, scoped, tag = 'internal scratch']
  %s0 = inlined_call_operand.hbm [shape: f32[32,128], index: 0, kind: input, shape index: {}]
  %s1 = inlined_call_operand.hbm [shape: f32[128,128], index: 1, kind: input, shape index: {}]
  %s2 = inlined_call_operand.vmem [shape: f32[1,128], index: 2, kind: input, shape index: {}]
  %s3 = inlined_call_operand.hbm [shape: f32[32,128], index: 3, kind: output, shape index: {}]
  %s4 = sld [smem:[#allocation0]]
  $region53: #{tpu_custom_call.1} parent=0
    _
  %s6 = ssub.s32 1, %s4
  %s7 = scalar_select 0, %s6, %s4
  $region1: #{tpu_custom_call.1} parent=0
    #allocation2 [shape = 'u8[16384]{0}', space=vmem, size = 0x4000, scoped, tag = 'input window, operand 0']
    #allocation3 [shape = 's32[2]{0}', space=sflag, size = 0x8, scoped, tag = 'scoped memory for tpu_custom_call.1']
    #allocation4 [shape = 's32[2]{0}', space=sflag, size = 0x8, scoped, tag = 'scoped memory for tpu_custom_call.1']
    #allocation5 [shape = 'u8[65536]{0}', space=vmem, size = 0x10000, scoped, tag = 'input window, operand 1, single buffered']
    #allocation6 [shape = 's32[1]{0}', space=sflag, size = 0x4, scoped, tag = 'scoped memory for tpu_custom_call.1']
    #allocation7 [shape = 'u8[16384]{0}', space=vmem, size = 0x4000, scoped, tag = 'output window, operand 0']
    %8 = vsyncpa [#allocation3], 0
    %s9 = scalar_lea.sflag [#allocation3], 1
    %10 = vsyncpa %s9, 0
    %11 = vsyncpa [#allocation6], 0
    %12 = vsyncpa [#allocation4], 0
    %s13 = scalar_lea.sflag [#allocation4], 1
    %14 = vsyncpa %s13, 0
    loop: start=0, step=1, limit=4
    $region2: #{tpu_custom_call.1} parent=1 // loop_pre_header
      _
    $region3: #{tpu_custom_call.1} parent=1 // loop_header
      %s16 = sphi 0, %s20
      %p17 = scmp.ge.s32.totalorder %s16, 4
      %s23 = sphi 0, %s35
      %s24 = sphi 0, %s31
      %s25 = sphi 0, %s23
      %s26 = sphi 0, %s24
      %s27 = sphi 0, %s25
      %s28 = sphi 0, %s26
      %s38 = sphi 0, %s40
      %s41 = sphi 0, %s38
      %s42 = sphi 0, %s41
      %s58 = sphi 0, %s42
      %s64 = sphi 0, %s66
      %s67 = sphi 0, %s64
      %s68 = sphi 0, %s67
      %s84 = sphi 0, %s68
      %s90 = sphi 0, %s92
      %s93 = sphi 0, %s90
      %s94 = sphi 0, %s93
      %s110 = sphi 0, %s94
      %s118 = sphi 0, %s120
      %s121 = sphi 0, %s118
      %s122 = sphi 0, %s121
      %s138 = sphi 0, %s122
    $region4: #{tpu_custom_call.1} parent=1 // loop_header_branch
      %19 = sbr.rel (%p17) target = $region8
    $region5: #{tpu_custom_call.1} parent=1 // loop_body
      %s21 = ssub.s32 %s16, 1
      %s22 = ssub.s32 %s16, 2
      %s29 = sadd.s32 1, %s24
      %p30 = scmp.ge.s32.totalorder %s29, 1
      %s31 = scalar_select %p30, 0, %s29
      %s32 = sadd.s32 1, %s23
      %s33 = scalar_select %p30, %s32, %s23
      %p34 = scmp.ge.s32.totalorder %s33, 2
      %s35 = scalar_select %p34, 0, %s33
      %s36 = ssub.s32 %s23, %s35
      %p37 = scmp.eq.s32.totalorder %s36, 0
      %s39 = sadd.s32 %s38, 1
      %s40 = scalar_select %p37, %s38, %s39
      %p43 = pneg %p37
      %p44 = scmp.eq.s32.totalorder %s16, 1
      %p45 = por %p43, %p44
      %p46 = scmp.ne.s32.totalorder %s38, %s41
      %p47 = scmp.eq.s32.totalorder %s16, 0
      %p48 = por %p46, %p47
      %p49 = scmp.ne.s32.totalorder %s38, %s41
      %p50 = scmp.eq.s32.totalorder %s21, 1
      %p51 = por %p49, %p50
      %p52 = scmp.ne.s32.totalorder %s41, %s42
      %p53 = scmp.eq.s32.totalorder %s21, 0
      %p54 = por %p52, %p53
      %p55 = scmp.ne.s32.totalorder %s41, %s42
      %p56 = scmp.eq.s32.totalorder %s22, 1
      %p57 = por %p55, %p56
      %p59 = scmp.ne.s32.totalorder %s42, %s58
      %p60 = scmp.eq.s32.totalorder %s22, 0
      %p61 = por %p59, %p60
      %s62 = ssub.s32 %s24, %s31
      %p63 = scmp.eq.s32.totalorder %s62, 0
      %s65 = sadd.s32 %s64, 1
      %s66 = scalar_select %p63, %s64, %s65
      %p69 = pneg %p63
      %p70 = scmp.eq.s32.totalorder %s16, 1
      %p71 = por %p69, %p70
      %p72 = scmp.ne.s32.totalorder %s64, %s67
      %p73 = scmp.eq.s32.totalorder %s16, 0
      %p74 = por %p72, %p73
      %p75 = scmp.ne.s32.totalorder %s64, %s67
      %p76 = scmp.eq.s32.totalorder %s21, 1
      %p77 = por %p75, %p76
      %p78 = scmp.ne.s32.totalorder %s67, %s68
      %p79 = scmp.eq.s32.totalorder %s21, 0
      %p80 = por %p78, %p79
      %p81 = scmp.ne.s32.totalorder %s67, %s68
      %p82 = scmp.eq.s32.totalorder %s22, 1
      %p83 = por %p81, %p82
      %p85 = scmp.ne.s32.totalorder %s68, %s84
      %p86 = scmp.eq.s32.totalorder %s22, 0
      %p87 = por %p85, %p86
      %s88 = ssub.s32 %s24, %s31
      %p89 = scmp.eq.s32.totalorder %s88, 0
      %s91 = sadd.s32 %s90, 1
      %s92 = scalar_select %p89, %s90, %s91
      %p95 = pneg %p89
      %p96 = scmp.eq.s32.totalorder %s16, 1
      %p97 = por %p95, %p96
      %p98 = scmp.ne.s32.totalorder %s90, %s93
      %p99 = scmp.eq.s32.totalorder %s16, 0
      %p100 = por %p98, %p99
      %p101 = scmp.ne.s32.totalorder %s90, %s93
      %p102 = scmp.eq.s32.totalorder %s21, 1
      %p103 = por %p101, %p102
      %p104 = scmp.ne.s32.totalorder %s93, %s94
      %p105 = scmp.eq.s32.totalorder %s21, 0
      %p106 = por %p104, %p105
      %p107 = scmp.ne.s32.totalorder %s93, %s94
      %p108 = scmp.eq.s32.totalorder %s22, 1
      %p109 = por %p107, %p108
      %p111 = scmp.ne.s32.totalorder %s94, %s110
      %p112 = scmp.eq.s32.totalorder %s22, 0
      %p113 = por %p111, %p112
      %s114 = ssub.s32 %s23, %s35
      %s115 = ssub.s32 %s24, %s31
      %s116 = sor.u32 %s114, %s115
      %p117 = scmp.eq.s32.totalorder %s116, 0
      %s119 = sadd.s32 %s118, 1
      %s120 = scalar_select %p117, %s118, %s119
      %p123 = pneg %p117
      %p124 = scmp.eq.s32.totalorder %s16, 1
      %p125 = por %p123, %p124
      %p126 = scmp.ne.s32.totalorder %s118, %s121
      %p127 = scmp.eq.s32.totalorder %s16, 0
      %p128 = por %p126, %p127
      %p129 = scmp.ne.s32.totalorder %s118, %s121
      %p130 = scmp.eq.s32.totalorder %s21, 1
      %p131 = por %p129, %p130
      %p132 = scmp.ne.s32.totalorder %s121, %s122
      %p133 = scmp.eq.s32.totalorder %s21, 0
      %p134 = por %p132, %p133
      %p135 = scmp.ne.s32.totalorder %s121, %s122
      %p136 = scmp.eq.s32.totalorder %s22, 1
      %p137 = por %p135, %p136
      %p139 = scmp.ne.s32.totalorder %s122, %s138
      %p140 = scmp.eq.s32.totalorder %s22, 0
      %p141 = por %p139, %p140
      %p142 = scmp.le.s32.totalorder 1, %s16
      %p143 = scmp.lt.s32.totalorder %s16, 3
      %p144 = pnand %p142, %p143
      %p145 = pneg %p144
      // Predicated region
      $region9: #{tpu_custom_call.1} parent=5 // pred_check
        _
      $region10: #{tpu_custom_call.1} parent=5 // pred_check_branch
        %147 = sbr.rel (%p144) target = $region12
      $region11: #{tpu_custom_call.1} parent=5 // pred_region
        %s148 = ssub.s32 %s16, 1
        // Predicated region
        $region13: #{tpu_custom_call.1} parent=11 // pred_check
          %p149 = pneg %p80
        $region14: #{tpu_custom_call.1} parent=11 // pred_check_branch
          %151 = sbr.rel (%p149) target = $region16
        $region15: #{tpu_custom_call.1} parent=11 // pred_region
          %s153 = ssub.s32 2048, 2048
          %154 = vsyncadd [#allocation6], %s153
          %s155 = smul.addr %s26, 128
          %s156 = scalar_lea.hbm %s1, %s155
          %s157 = sshll.u32 [#allocation5], 4
          %s158 = int_to_ptr.vmem [resolvable:$true] %s157
          %163 = dma.hbm_to_vmem [thread:$0]  %s156, 2048, %s158, [#allocation6], 128, 128, 8
        $region16: #{tpu_custom_call.1} parent=11 // pred_fallthru
          _
        // Predicated region
        $region17: #{tpu_custom_call.1} parent=11 // pred_check
          %p164 = pneg %p106
        $region18: #{tpu_custom_call.1} parent=11 // pred_check_branch
          %166 = sbr.rel (%p164) target = $region20
        $region19: #{tpu_custom_call.1} parent=11 // pred_region
          %p167 = scmp.lt.s32.totalorder %s26, 0
          %s168 = scalar_select %p167, %s26, 0
          %s169 = scalar_lea.vmem %s2, %s168
        $region20: #{tpu_custom_call.1} parent=11 // pred_fallthru
          _
      $region12: #{tpu_custom_call.1} parent=5 // pred_fallthru
        _
      %p170 = scmp.lt.s32.totalorder %s16, 2
      // Predicated region
      $region21: #{tpu_custom_call.1} parent=5 // pred_check
        %p171 = pneg %p170
      $region22: #{tpu_custom_call.1} parent=5 // pred_check_branch
        %173 = sbr.rel (%p171) target = $region24
      $region23: #{tpu_custom_call.1} parent=5 // pred_region
        // Predicated region
        $region25: #{tpu_custom_call.1} parent=23 // pred_check
          %p174 = pneg %p48
        $region26: #{tpu_custom_call.1} parent=23 // pred_check_branch
          %176 = sbr.rel (%p174) target = $region28
        $region27: #{tpu_custom_call.1} parent=23 // pred_region
          %s177 = sand.u32 %s38, 1
          %s178 = scalar_lea.sflag [#allocation3], %s177
          %s179 = sand.u32 %s38, 1
          %s180 = smul.addr %s179, 16
          %s181 = scalar_lea.vmem [#allocation2], %s180
          %s182 = smul.u32 2, %s23
          %s184 = ssub.s32 256, 256
          %185 = vsyncadd %s178, %s184
          %s186 = smul.addr %s182, 128
          %s187 = scalar_lea.hbm %s0, %s186
          %s188 = sshll.u32 %s181, 4
          %s189 = int_to_ptr.vmem [resolvable:$true] %s188
          %194 = dma.hbm_to_vmem [thread:$0]  %s187, 256, %s189, %s178, 128, 128, 8
        $region28: #{tpu_custom_call.1} parent=23 // pred_fallthru
          _
      $region24: #{tpu_custom_call.1} parent=5 // pred_fallthru
        _
      %p195 = scmp.le.s32.totalorder 1, %s16
      %p196 = scmp.lt.s32.totalorder %s16, 3
      %p197 = pnand %p195, %p196
      %p198 = pneg %p197
      // Predicated region
      $region29: #{tpu_custom_call.1} parent=5 // pred_check
        _
      $region30: #{tpu_custom_call.1} parent=5 // pred_check_branch
        %200 = sbr.rel (%p197) target = $region32
      $region31: #{tpu_custom_call.1} parent=5 // pred_region
        %s201 = ssub.s32 %s16, 1
        %s202 = sand.u32 %s41, 1
        %s203 = scalar_lea.sflag [#allocation3], %s202
        %s204 = sand.u32 %s41, 1
        %s205 = smul.addr %s204, 16
        %s206 = scalar_lea.vmem [#allocation2], %s205
        // Predicated region
        $region33: #{tpu_custom_call.1} parent=31 // pred_check
          %p207 = pneg %p54
        $region34: #{tpu_custom_call.1} parent=31 // pred_check_branch
          %209 = sbr.rel (%p207) target = $region36
        $region35: #{tpu_custom_call.1} parent=31 // pred_region
          %210 = dma.done %s203, 256
        $region36: #{tpu_custom_call.1} parent=31 // pred_fallthru
          _
        // Predicated region
        $region37: #{tpu_custom_call.1} parent=31 // pred_check
          %p211 = pneg %p80
        $region38: #{tpu_custom_call.1} parent=31 // pred_check_branch
          %213 = sbr.rel (%p211) target = $region40
        $region39: #{tpu_custom_call.1} parent=31 // pred_region
          %214 = dma.done [#allocation6], 2048
        $region40: #{tpu_custom_call.1} parent=31 // pred_fallthru
          _
        %s215 = sand.u32 %s41, 1
        %s216 = scalar_lea.sflag [#allocation3], %s215
        %s217 = sand.u32 %s41, 1
        %s218 = smul.addr %s217, 16
        %s219 = scalar_lea.vmem [#allocation2], %s218
        %p220 = pneg %p54
        %p221 = pneg %p51
        %p222 = pneg %p80
        %p223 = pneg %p77
        %p224 = scmp.lt.s32.totalorder %s26, 0
        %s225 = scalar_select %p224, %s26, 0
        %s226 = scalar_lea.vmem %s2, %s225
        %p227 = pneg %p106
        %p228 = pneg %p103
        %p229 = pneg %p134
        %p230 = pneg %p131
        %s231 = sand.u32 %s121, 1
        %s232 = scalar_lea.sflag [#allocation4], %s231
        %s233 = sand.u32 %s121, 1
        %s234 = smul.addr %s233, 16
        %s235 = scalar_lea.vmem [#allocation7], %s234
        %s236 = smul.u32 2, %s25
        %p237 = scmp.lt.s32.totalorder %s26, 0
        %s238 = scalar_select %p237, %s26, 0
        %s239 = scalar_lea.vmem %s2, %s238
        %s240 = smul.u32 2, %s25
        %v241 = vld [vmem:[%s206] sm:$0xff]
        %v242 = vld [vmem:[%s206 + $0x8] sm:$0xff]
        %v243 = vld [vmem:[#allocation5] sm:$0xff]
        %v244 = vld [vmem:[#allocation5 + $0x8] sm:$0xff]
        %v245 = vld [vmem:[#allocation5 + $0x10] sm:$0xff]
        %v246 = vld [vmem:[#allocation5 + $0x18] sm:$0xff]
        %v247 = vld [vmem:[#allocation5 + $0x20] sm:$0xff]
        %v248 = vld [vmem:[#allocation5 + $0x28] sm:$0xff]
        %v249 = vld [vmem:[#allocation5 + $0x30] sm:$0xff]
        %v250 = vld [vmem:[#allocation5 + $0x38] sm:$0xff]
        %v251 = vld [vmem:[#allocation5 + $0x40] sm:$0xff]
        %v252 = vld [vmem:[#allocation5 + $0x48] sm:$0xff]
        %v253 = vld [vmem:[#allocation5 + $0x50] sm:$0xff]
        %v254 = vld [vmem:[#allocation5 + $0x58] sm:$0xff]
        %v255 = vld [vmem:[#allocation5 + $0x60] sm:$0xff]
        %v256 = vld [vmem:[#allocation5 + $0x68] sm:$0xff]
        %v257 = vld [vmem:[#allocation5 + $0x70] sm:$0xff]
        %v258 = vld [vmem:[#allocation5 + $0x78] sm:$0xff]
        %v259 = vld [vmem:[%s239] sm:$0x1]
        %v261 = vlaneseq
        %v262 = vshrl.u32 %v261, 7
        %v263 = vsub.s32 0, %v262
        %v264 = vrot.slane %v259, %v263
        %266 = vmatprep.subr.mxu0 0.0
        %v267 = vand.u32 %v243, 4294901760
        %268 = vmatpush1.msra.mxu0 %v267
        %269 = vmatprep.subr.mxu0 0.0
        %v270 = vand.u32 %v244, 4294901760
        %271 = vmatpush1.msra.mxu0 %v270
        %272 = vmatprep.subr.mxu0 0.0
        %v273 = vand.u32 %v245, 4294901760
        %274 = vmatpush1.msra.mxu0 %v273
        %275 = vmatprep.subr.mxu0 0.0
        %v276 = vand.u32 %v246, 4294901760
        %277 = vmatpush1.msra.mxu0 %v276
        %278 = vmatprep.subr.mxu0 0.0
        %v279 = vand.u32 %v247, 4294901760
        %280 = vmatpush1.msra.mxu0 %v279
        %281 = vmatprep.subr.mxu0 0.0
        %v282 = vand.u32 %v248, 4294901760
        %283 = vmatpush1.msra.mxu0 %v282
        %284 = vmatprep.subr.mxu0 0.0
        %v285 = vand.u32 %v249, 4294901760
        %286 = vmatpush1.msra.mxu0 %v285
        %287 = vmatprep.subr.mxu0 0.0
        %v288 = vand.u32 %v250, 4294901760
        %289 = vmatpush1.msra.mxu0 %v288
        %290 = vmatprep.subr.mxu0 0.0
        %v291 = vand.u32 %v251, 4294901760
        %292 = vmatpush1.msra.mxu0 %v291
        %293 = vmatprep.subr.mxu0 0.0
        %v294 = vand.u32 %v252, 4294901760
        %295 = vmatpush1.msra.mxu0 %v294
        %296 = vmatprep.subr.mxu0 0.0
        %v297 = vand.u32 %v253, 4294901760
        %298 = vmatpush1.msra.mxu0 %v297
        %299 = vmatprep.subr.mxu0 0.0
        %v300 = vand.u32 %v254, 4294901760
        %301 = vmatpush1.msra.mxu0 %v300
        %302 = vmatprep.subr.mxu0 0.0
        %v303 = vand.u32 %v255, 4294901760
        %304 = vmatpush1.msra.mxu0 %v303
        %305 = vmatprep.subr.mxu0 0.0
        %v306 = vand.u32 %v256, 4294901760
        %307 = vmatpush1.msra.mxu0 %v306
        %308 = vmatprep.subr.mxu0 0.0
        %v309 = vand.u32 %v257, 4294901760
        %310 = vmatpush1.msra.mxu0 %v309
        %311 = vmatprep.subr.mxu0 0.0
        %v312 = vand.u32 %v258, 4294901760
        %313 = vmatpush1.msra.mxu0 %v312
        %314 = vmatprep.subr.mxu0 0.0
        %315 = vmatpush1.msra.mxu0 0.0
        %316 = vmatprep.subr.mxu0 0.0
        %317 = vmatpush1.msra.mxu0 0.0
        %318 = vmatprep.subr.mxu0 0.0
        %319 = vmatpush1.msra.mxu0 0.0
        %320 = vmatprep.subr.mxu0 0.0
        %321 = vmatpush1.msra.mxu0 0.0
        %322 = vmatprep.subr.mxu0 0.0
        %323 = vmatpush1.msra.mxu0 0.0
        %324 = vmatprep.subr.mxu0 0.0
        %325 = vmatpush1.msra.mxu0 0.0
        %326 = vmatprep.subr.mxu0 0.0
        %327 = vmatpush1.msra.mxu0 0.0
        %328 = vmatprep.subr.mxu0 0.0
        %329 = vmatpush1.msra.mxu0 0.0
        %330 = vmatprep.subr.mxu0 0.0
        %331 = vmatpush1.msra.mxu0 0.0
        %332 = vmatprep.subr.mxu0 0.0
        %333 = vmatpush1.msra.mxu0 0.0
        %334 = vmatprep.subr.mxu0 0.0
        %335 = vmatpush1.msra.mxu0 0.0
        %336 = vmatprep.subr.mxu0 0.0
        %337 = vmatpush1.msra.mxu0 0.0
        %338 = vmatprep.subr.mxu0 0.0
        %339 = vmatpush1.msra.mxu0 0.0
        %340 = vmatprep.subr.mxu0 0.0
        %341 = vmatpush1.msra.mxu0 0.0
        %342 = vmatprep.subr.mxu0 0.0
        %343 = vmatpush1.msra.mxu0 0.0
        %344 = vmatprep.subr.mxu0 0.0
        %345 = vmatpush1.msra.mxu0 0.0
        %346 = vmatprep.mubr.f32.mxu0 0.0
        %v347 = vand.u32 %v241, 4294901760
        %v348 = vsub.f32 %v241, %v347
        %v349 = vand.u32 %v348, 4294901760
        %v350 = vsub.f32 %v348, %v349
        %v351 = vand.u32 %v350, 4294901760
        %352 = vmatmul.mubr.f32.gmra.mrb[0].mxu0 %v351
        %v353 = vpop.f32.mrb[0].mxu0
        %v354 = vadd.f32 %v264, %v353
        %v355 = vpop.f32.mrb[0].mxu0
        %356 = vmatprep.mubr.f32.mxu0 0.0
        %v357 = vand.u32 %v242, 4294901760
        %v358 = vsub.f32 %v242, %v357
        %v359 = vand.u32 %v358, 4294901760
        %v360 = vsub.f32 %v358, %v359
        %v361 = vand.u32 %v360, 4294901760
        %362 = vmatmul.mubr.f32.gmra.mrb[0].mxu0 %v361
        %v363 = vpop.f32.mrb[0].mxu0
        %v364 = vadd.f32 %v264, %v363
        %v365 = vpop.f32.mrb[0].mxu0
        %366 = vdwg.mxu0
        %367 = vmatprep.subr.mxu0 0.0
        %v368 = vand.u32 %v243, 4294901760
        %v369 = vsub.f32 %v243, %v368
        %v370 = vand.u32 %v369, 4294901760
        %v371 = vsub.f32 %v369, %v370
        %v372 = vand.u32 %v371, 4294901760
        %373 = vmatpush1.msra.mxu0 %v372
        %374 = vmatprep.subr.mxu0 0.0
        %v375 = vand.u32 %v244, 4294901760
        %v376 = vsub.f32 %v244, %v375
        %v377 = vand.u32 %v376, 4294901760
        %v378 = vsub.f32 %v376, %v377
        %v379 = vand.u32 %v378, 4294901760
        %380 = vmatpush1.msra.mxu0 %v379
        %381 = vmatprep.subr.mxu0 0.0
        %v382 = vand.u32 %v245, 4294901760
        %v383 = vsub.f32 %v245, %v382
        %v384 = vand.u32 %v383, 4294901760
        %v385 = vsub.f32 %v383, %v384
        %v386 = vand.u32 %v385, 4294901760
        %387 = vmatpush1.msra.mxu0 %v386
        %388 = vmatprep.subr.mxu0 0.0
        %v389 = vand.u32 %v246, 4294901760
        %v390 = vsub.f32 %v246, %v389
        %v391 = vand.u32 %v390, 4294901760
        %v392 = vsub.f32 %v390, %v391
        %v393 = vand.u32 %v392, 4294901760
        %394 = vmatpush1.msra.mxu0 %v393
        %395 = vmatprep.subr.mxu0 0.0
        %v396 = vand.u32 %v247, 4294901760
        %v397 = vsub.f32 %v247, %v396
        %v398 = vand.u32 %v397, 4294901760
        %v399 = vsub.f32 %v397, %v398
        %v400 = vand.u32 %v399, 4294901760
        %401 = vmatpush1.msra.mxu0 %v400
        %402 = vmatprep.subr.mxu0 0.0
        %v403 = vand.u32 %v248, 4294901760
        %v404 = vsub.f32 %v248, %v403
        %v405 = vand.u32 %v404, 4294901760
        %v406 = vsub.f32 %v404, %v405
        %v407 = vand.u32 %v406, 4294901760
        %408 = vmatpush1.msra.mxu0 %v407
        %409 = vmatprep.subr.mxu0 0.0
        %v410 = vand.u32 %v249, 4294901760
        %v411 = vsub.f32 %v249, %v410
        %v412 = vand.u32 %v411, 4294901760
        %v413 = vsub.f32 %v411, %v412
        %v414 = vand.u32 %v413, 4294901760
        %415 = vmatpush1.msra.mxu0 %v414
        %416 = vmatprep.subr.mxu0 0.0
        %v417 = vand.u32 %v250, 4294901760
        %v418 = vsub.f32 %v250, %v417
        %v419 = vand.u32 %v418, 4294901760
        %v420 = vsub.f32 %v418, %v419
        %v421 = vand.u32 %v420, 4294901760
        %422 = vmatpush1.msra.mxu0 %v421
        %423 = vmatprep.subr.mxu0 0.0
        %v424 = vand.u32 %v251, 4294901760
        %v425 = vsub.f32 %v251, %v424
        %v426 = vand.u32 %v425, 4294901760
        %v427 = vsub.f32 %v425, %v426
        %v428 = vand.u32 %v427, 4294901760
        %429 = vmatpush1.msra.mxu0 %v428
        %430 = vmatprep.subr.mxu0 0.0
        %v431 = vand.u32 %v252, 4294901760
        %v432 = vsub.f32 %v252, %v431
        %v433 = vand.u32 %v432, 4294901760
        %v434 = vsub.f32 %v432, %v433
        %v435 = vand.u32 %v434, 4294901760
        %436 = vmatpush1.msra.mxu0 %v435
        %437 = vmatprep.subr.mxu0 0.0
        %v438 = vand.u32 %v253, 4294901760
        %v439 = vsub.f32 %v253, %v438
        %v440 = vand.u32 %v439, 4294901760
        %v441 = vsub.f32 %v439, %v440
        %v442 = vand.u32 %v441, 4294901760
        %443 = vmatpush1.msra.mxu0 %v442
        %444 = vmatprep.subr.mxu0 0.0
        %v445 = vand.u32 %v254, 4294901760
        %v446 = vsub.f32 %v254, %v445
        %v447 = vand.u32 %v446, 4294901760
        %v448 = vsub.f32 %v446, %v447
        %v449 = vand.u32 %v448, 4294901760
        %450 = vmatpush1.msra.mxu0 %v449
        %451 = vmatprep.subr.mxu0 0.0
        %v452 = vand.u32 %v255, 4294901760
        %v453 = vsub.f32 %v255, %v452
        %v454 = vand.u32 %v453, 4294901760
        %v455 = vsub.f32 %v453, %v454
        %v456 = vand.u32 %v455, 4294901760
        %457 = vmatpush1.msra.mxu0 %v456
        %458 = vmatprep.subr.mxu0 0.0
        %v459 = vand.u32 %v256, 4294901760
        %v460 = vsub.f32 %v256, %v459
        %v461 = vand.u32 %v460, 4294901760
        %v462 = vsub.f32 %v460, %v461
        %v463 = vand.u32 %v462, 4294901760
        %464 = vmatpush1.msra.mxu0 %v463
        %465 = vmatprep.subr.mxu0 0.0
        %v466 = vand.u32 %v257, 4294901760
        %v467 = vsub.f32 %v257, %v466
        %v468 = vand.u32 %v467, 4294901760
        %v469 = vsub.f32 %v467, %v468
        %v470 = vand.u32 %v469, 4294901760
        %471 = vmatpush1.msra.mxu0 %v470
        %472 = vmatprep.subr.mxu0 0.0
        %v473 = vand.u32 %v258, 4294901760
        %v474 = vsub.f32 %v258, %v473
        %v475 = vand.u32 %v474, 4294901760
        %v476 = vsub.f32 %v474, %v475
        %v477 = vand.u32 %v476, 4294901760
        %478 = vmatpush1.msra.mxu0 %v477
        %479 = vmatprep.subr.mxu0 0.0
        %480 = vmatpush1.msra.mxu0 0.0
        %481 = vmatprep.subr.mxu0 0.0
        %482 = vmatpush1.msra.mxu0 0.0
        %483 = vmatprep.subr.mxu0 0.0
        %484 = vmatpush1.msra.mxu0 0.0
        %485 = vmatprep.subr.mxu0 0.0
        %486 = vmatpush1.msra.mxu0 0.0
        %487 = vmatprep.subr.mxu0 0.0
        %488 = vmatpush1.msra.mxu0 0.0
        %489 = vmatprep.subr.mxu0 0.0
        %490 = vmatpush1.msra.mxu0 0.0
        %491 = vmatprep.subr.mxu0 0.0
        %492 = vmatpush1.msra.mxu0 0.0
        %493 = vmatprep.subr.mxu0 0.0
        %494 = vmatpush1.msra.mxu0 0.0
        %495 = vmatprep.subr.mxu0 0.0
        %496 = vmatpush1.msra.mxu0 0.0
        %497 = vmatprep.subr.mxu0 0.0
        %498 = vmatpush1.msra.mxu0 0.0
        %499 = vmatprep.subr.mxu0 0.0
        %500 = vmatpush1.msra.mxu0 0.0
        %501 = vmatprep.subr.mxu0 0.0
        %502 = vmatpush1.msra.mxu0 0.0
        %503 = vmatprep.subr.mxu0 0.0
        %504 = vmatpush1.msra.mxu0 0.0
        %505 = vmatprep.subr.mxu0 0.0
        %506 = vmatpush1.msra.mxu0 0.0
        %507 = vmatprep.subr.mxu0 0.0
        %508 = vmatpush1.msra.mxu0 0.0
        %509 = vmatprep.subr.mxu0 0.0
        %510 = vmatpush1.msra.mxu0 0.0
        %511 = vmatprep.mubr.f32.mxu0 0.0
        %v512 = vand.u32 %v241, 4294901760
        %513 = vmatmul.mubr.f32.gmra.mrb[0].mxu0 %v512
        %v514 = vpop.f32.mrb[0].mxu0
        %v515 = vadd.f32 %v354, %v514
        %v516 = vpop.f32.mrb[0].mxu0
        %517 = vmatprep.mubr.f32.mxu0 0.0
        %v518 = vand.u32 %v242, 4294901760
        %519 = vmatmul.mubr.f32.gmra.mrb[0].mxu0 %v518
        %v520 = vpop.f32.mrb[0].mxu0
        %v521 = vadd.f32 %v364, %v520
        %v522 = vpop.f32.mrb[0].mxu0
        %523 = vdwg.mxu0
        %524 = vmatprep.subr.mxu0 0.0
        %v525 = vand.u32 %v243, 4294901760
        %v526 = vsub.f32 %v243, %v525
        %527 = vmatpush1.msra.mxu0 %v526
        %528 = vmatprep.subr.mxu0 0.0
        %v529 = vand.u32 %v244, 4294901760
        %v530 = vsub.f32 %v244, %v529
        %531 = vmatpush1.msra.mxu0 %v530
        %532 = vmatprep.subr.mxu0 0.0
        %v533 = vand.u32 %v245, 4294901760
        %v534 = vsub.f32 %v245, %v533
        %535 = vmatpush1.msra.mxu0 %v534
        %536 = vmatprep.subr.mxu0 0.0
        %v537 = vand.u32 %v246, 4294901760
        %v538 = vsub.f32 %v246, %v537
        %539 = vmatpush1.msra.mxu0 %v538
        %540 = vmatprep.subr.mxu0 0.0
        %v541 = vand.u32 %v247, 4294901760
        %v542 = vsub.f32 %v247, %v541
        %543 = vmatpush1.msra.mxu0 %v542
        %544 = vmatprep.subr.mxu0 0.0
        %v545 = vand.u32 %v248, 4294901760
        %v546 = vsub.f32 %v248, %v545
        %547 = vmatpush1.msra.mxu0 %v546
        %548 = vmatprep.subr.mxu0 0.0
        %v549 = vand.u32 %v249, 4294901760
        %v550 = vsub.f32 %v249, %v549
        %551 = vmatpush1.msra.mxu0 %v550
        %552 = vmatprep.subr.mxu0 0.0
        %v553 = vand.u32 %v250, 4294901760
        %v554 = vsub.f32 %v250, %v553
        %555 = vmatpush1.msra.mxu0 %v554
        %556 = vmatprep.subr.mxu0 0.0
        %v557 = vand.u32 %v251, 4294901760
        %v558 = vsub.f32 %v251, %v557
        %559 = vmatpush1.msra.mxu0 %v558
        %560 = vmatprep.subr.mxu0 0.0
        %v561 = vand.u32 %v252, 4294901760
        %v562 = vsub.f32 %v252, %v561
        %563 = vmatpush1.msra.mxu0 %v562
        %564 = vmatprep.subr.mxu0 0.0
        %v565 = vand.u32 %v253, 4294901760
        %v566 = vsub.f32 %v253, %v565
        %567 = vmatpush1.msra.mxu0 %v566
        %568 = vmatprep.subr.mxu0 0.0
        %v569 = vand.u32 %v254, 4294901760
        %v570 = vsub.f32 %v254, %v569
        %571 = vmatpush1.msra.mxu0 %v570
        %572 = vmatprep.subr.mxu0 0.0
        %v573 = vand.u32 %v255, 4294901760
        %v574 = vsub.f32 %v255, %v573
        %575 = vmatpush1.msra.mxu0 %v574
        %576 = vmatprep.subr.mxu0 0.0
        %v577 = vand.u32 %v256, 4294901760
        %v578 = vsub.f32 %v256, %v577
        %579 = vmatpush1.msra.mxu0 %v578
        %580 = vmatprep.subr.mxu0 0.0
        %v581 = vand.u32 %v257, 4294901760
        %v582 = vsub.f32 %v257, %v581
        %583 = vmatpush1.msra.mxu0 %v582
        %584 = vmatprep.subr.mxu0 0.0
        %v585 = vand.u32 %v258, 4294901760
        %v586 = vsub.f32 %v258, %v585
        %587 = vmatpush1.msra.mxu0 %v586
        %588 = vmatprep.subr.mxu0 0.0
        %589 = vmatpush1.msra.mxu0 0.0
        %590 = vmatprep.subr.mxu0 0.0
        %591 = vmatpush1.msra.mxu0 0.0
        %592 = vmatprep.subr.mxu0 0.0
        %593 = vmatpush1.msra.mxu0 0.0
        %594 = vmatprep.subr.mxu0 0.0
        %595 = vmatpush1.msra.mxu0 0.0
        %596 = vmatprep.subr.mxu0 0.0
        %597 = vmatpush1.msra.mxu0 0.0
        %598 = vmatprep.subr.mxu0 0.0
        %599 = vmatpush1.msra.mxu0 0.0
        %600 = vmatprep.subr.mxu0 0.0
        %601 = vmatpush1.msra.mxu0 0.0
        %602 = vmatprep.subr.mxu0 0.0
        %603 = vmatpush1.msra.mxu0 0.0
        %604 = vmatprep.subr.mxu0 0.0
        %605 = vmatpush1.msra.mxu0 0.0
        %606 = vmatprep.subr.mxu0 0.0
        %607 = vmatpush1.msra.mxu0 0.0
        %608 = vmatprep.subr.mxu0 0.0
        %609 = vmatpush1.msra.mxu0 0.0
        %610 = vmatprep.subr.mxu0 0.0
        %611 = vmatpush1.msra.mxu0 0.0
        %612 = vmatprep.subr.mxu0 0.0
        %613 = vmatpush1.msra.mxu0 0.0
        %614 = vmatprep.subr.mxu0 0.0
        %615 = vmatpush1.msra.mxu0 0.0
        %616 = vmatprep.subr.mxu0 0.0
        %617 = vmatpush1.msra.mxu0 0.0
        %618 = vmatprep.subr.mxu0 0.0
        %619 = vmatpush1.msra.mxu0 0.0
        %620 = vmatprep.mubr.f32.mxu0 0.0
        %v621 = vand.u32 %v241, 4294901760
        %v622 = vsub.f32 %v241, %v621
        %623 = vmatmul.mubr.f32.gmra.mrb[0].mxu0 %v622
        %v624 = vpop.f32.mrb[0].mxu0
        %v625 = vadd.f32 %v515, %v624
        %v626 = vpop.f32.mrb[0].mxu0
        %627 = vmatprep.mubr.f32.mxu0 0.0
        %v628 = vand.u32 %v242, 4294901760
        %v629 = vsub.f32 %v242, %v628
        %630 = vmatmul.mubr.f32.gmra.mrb[0].mxu0 %v629
        %v631 = vpop.f32.mrb[0].mxu0
        %v632 = vadd.f32 %v521, %v631
        %v633 = vpop.f32.mrb[0].mxu0
        %634 = vdwg.mxu0
        %635 = vmatprep.subr.mxu0 0.0
        %v636 = vand.u32 %v243, 4294901760
        %637 = vmatpush1.msra.mxu0 %v636
        %638 = vmatprep.subr.mxu0 0.0
        %v639 = vand.u32 %v244, 4294901760
        %640 = vmatpush1.msra.mxu0 %v639
        %641 = vmatprep.subr.mxu0 0.0
        %v642 = vand.u32 %v245, 4294901760
        %643 = vmatpush1.msra.mxu0 %v642
        %644 = vmatprep.subr.mxu0 0.0
        %v645 = vand.u32 %v246, 4294901760
        %646 = vmatpush1.msra.mxu0 %v645
        %647 = vmatprep.subr.mxu0 0.0
        %v648 = vand.u32 %v247, 4294901760
        %649 = vmatpush1.msra.mxu0 %v648
        %650 = vmatprep.subr.mxu0 0.0
        %v651 = vand.u32 %v248, 4294901760
        %652 = vmatpush1.msra.mxu0 %v651
        %653 = vmatprep.subr.mxu0 0.0
        %v654 = vand.u32 %v249, 4294901760
        %655 = vmatpush1.msra.mxu0 %v654
        %656 = vmatprep.subr.mxu0 0.0
        %v657 = vand.u32 %v250, 4294901760
        %658 = vmatpush1.msra.mxu0 %v657
        %659 = vmatprep.subr.mxu0 0.0
        %v660 = vand.u32 %v251, 4294901760
        %661 = vmatpush1.msra.mxu0 %v660
        %662 = vmatprep.subr.mxu0 0.0
        %v663 = vand.u32 %v252, 4294901760
        %664 = vmatpush1.msra.mxu0 %v663
        %665 = vmatprep.subr.mxu0 0.0
        %v666 = vand.u32 %v253, 4294901760
        %667 = vmatpush1.msra.mxu0 %v666
        %668 = vmatprep.subr.mxu0 0.0
        %v669 = vand.u32 %v254, 4294901760
        %670 = vmatpush1.msra.mxu0 %v669
        %671 = vmatprep.subr.mxu0 0.0
        %v672 = vand.u32 %v255, 4294901760
        %673 = vmatpush1.msra.mxu0 %v672
        %674 = vmatprep.subr.mxu0 0.0
        %v675 = vand.u32 %v256, 4294901760
        %676 = vmatpush1.msra.mxu0 %v675
        %677 = vmatprep.subr.mxu0 0.0
        %v678 = vand.u32 %v257, 4294901760
        %679 = vmatpush1.msra.mxu0 %v678
        %680 = vmatprep.subr.mxu0 0.0
        %v681 = vand.u32 %v258, 4294901760
        %682 = vmatpush1.msra.mxu0 %v681
        %683 = vmatprep.subr.mxu0 0.0
        %684 = vmatpush1.msra.mxu0 0.0
        %685 = vmatprep.subr.mxu0 0.0
        %686 = vmatpush1.msra.mxu0 0.0
        %687 = vmatprep.subr.mxu0 0.0
        %688 = vmatpush1.msra.mxu0 0.0
        %689 = vmatprep.subr.mxu0 0.0
        %690 = vmatpush1.msra.mxu0 0.0
        %691 = vmatprep.subr.mxu0 0.0
        %692 = vmatpush1.msra.mxu0 0.0
        %693 = vmatprep.subr.mxu0 0.0
        %694 = vmatpush1.msra.mxu0 0.0
        %695 = vmatprep.subr.mxu0 0.0
        %696 = vmatpush1.msra.mxu0 0.0
        %697 = vmatprep.subr.mxu0 0.0
        %698 = vmatpush1.msra.mxu0 0.0
        %699 = vmatprep.subr.mxu0 0.0
        %700 = vmatpush1.msra.mxu0 0.0
        %701 = vmatprep.subr.mxu0 0.0
        %702 = vmatpush1.msra.mxu0 0.0
        %703 = vmatprep.subr.mxu0 0.0
        %704 = vmatpush1.msra.mxu0 0.0
        %705 = vmatprep.subr.mxu0 0.0
        %706 = vmatpush1.msra.mxu0 0.0
        %707 = vmatprep.subr.mxu0 0.0
        %708 = vmatpush1.msra.mxu0 0.0
        %709 = vmatprep.subr.mxu0 0.0
        %710 = vmatpush1.msra.mxu0 0.0
        %711 = vmatprep.subr.mxu0 0.0
        %712 = vmatpush1.msra.mxu0 0.0
        %713 = vmatprep.subr.mxu0 0.0
        %714 = vmatpush1.msra.mxu0 0.0
        %715 = vmatprep.mubr.f32.mxu0 0.0
        %v716 = vand.u32 %v241, 4294901760
        %v717 = vsub.f32 %v241, %v716
        %v718 = vand.u32 %v717, 4294901760
        %719 = vmatmul.mubr.f32.gmra.mrb[0].mxu0 %v718
        %v720 = vpop.f32.mrb[0].mxu0
        %v721 = vadd.f32 %v625, %v720
        %v722 = vpop.f32.mrb[0].mxu0
        %723 = vmatprep.mubr.f32.mxu0 0.0
        %v724 = vand.u32 %v242, 4294901760
        %v725 = vsub.f32 %v242, %v724
        %v726 = vand.u32 %v725, 4294901760
        %727 = vmatmul.mubr.f32.gmra.mrb[0].mxu0 %v726
        %v728 = vpop.f32.mrb[0].mxu0
        %v729 = vadd.f32 %v632, %v728
        %v730 = vpop.f32.mrb[0].mxu0
        %731 = vdwg.mxu0
        %732 = vmatprep.subr.mxu0 0.0
        %v733 = vand.u32 %v243, 4294901760
        %v734 = vsub.f32 %v243, %v733
        %v735 = vand.u32 %v734, 4294901760
        %736 = vmatpush1.msra.mxu0 %v735
        %737 = vmatprep.subr.mxu0 0.0
        %v738 = vand.u32 %v244, 4294901760
        %v739 = vsub.f32 %v244, %v738
        %v740 = vand.u32 %v739, 4294901760
        %741 = vmatpush1.msra.mxu0 %v740
        %742 = vmatprep.subr.mxu0 0.0
        %v743 = vand.u32 %v245, 4294901760
        %v744 = vsub.f32 %v245, %v743
        %v745 = vand.u32 %v744, 4294901760
        %746 = vmatpush1.msra.mxu0 %v745
        %747 = vmatprep.subr.mxu0 0.0
        %v748 = vand.u32 %v246, 4294901760
        %v749 = vsub.f32 %v246, %v748
        %v750 = vand.u32 %v749, 4294901760
        %751 = vmatpush1.msra.mxu0 %v750
        %752 = vmatprep.subr.mxu0 0.0
        %v753 = vand.u32 %v247, 4294901760
        %v754 = vsub.f32 %v247, %v753
        %v755 = vand.u32 %v754, 4294901760
        %756 = vmatpush1.msra.mxu0 %v755
        %757 = vmatprep.subr.mxu0 0.0
        %v758 = vand.u32 %v248, 4294901760
        %v759 = vsub.f32 %v248, %v758
        %v760 = vand.u32 %v759, 4294901760
        %761 = vmatpush1.msra.mxu0 %v760
        %762 = vmatprep.subr.mxu0 0.0
        %v763 = vand.u32 %v249, 4294901760
        %v764 = vsub.f32 %v249, %v763
        %v765 = vand.u32 %v764, 4294901760
        %766 = vmatpush1.msra.mxu0 %v765
        %767 = vmatprep.subr.mxu0 0.0
        %v768 = vand.u32 %v250, 4294901760
        %v769 = vsub.f32 %v250, %v768
        %v770 = vand.u32 %v769, 4294901760
        %771 = vmatpush1.msra.mxu0 %v770
        %772 = vmatprep.subr.mxu0 0.0
        %v773 = vand.u32 %v251, 4294901760
        %v774 = vsub.f32 %v251, %v773
        %v775 = vand.u32 %v774, 4294901760
        %776 = vmatpush1.msra.mxu0 %v775
        %777 = vmatprep.subr.mxu0 0.0
        %v778 = vand.u32 %v252, 4294901760
        %v779 = vsub.f32 %v252, %v778
        %v780 = vand.u32 %v779, 4294901760
        %781 = vmatpush1.msra.mxu0 %v780
        %782 = vmatprep.subr.mxu0 0.0
        %v783 = vand.u32 %v253, 4294901760
        %v784 = vsub.f32 %v253, %v783
        %v785 = vand.u32 %v784, 4294901760
        %786 = vmatpush1.msra.mxu0 %v785
        %787 = vmatprep.subr.mxu0 0.0
        %v788 = vand.u32 %v254, 4294901760
        %v789 = vsub.f32 %v254, %v788
        %v790 = vand.u32 %v789, 4294901760
        %791 = vmatpush1.msra.mxu0 %v790
        %792 = vmatprep.subr.mxu0 0.0
        %v793 = vand.u32 %v255, 4294901760
        %v794 = vsub.f32 %v255, %v793
        %v795 = vand.u32 %v794, 4294901760
        %796 = vmatpush1.msra.mxu0 %v795
        %797 = vmatprep.subr.mxu0 0.0
        %v798 = vand.u32 %v256, 4294901760
        %v799 = vsub.f32 %v256, %v798
        %v800 = vand.u32 %v799, 4294901760
        %801 = vmatpush1.msra.mxu0 %v800
        %802 = vmatprep.subr.mxu0 0.0
        %v803 = vand.u32 %v257, 4294901760
        %v804 = vsub.f32 %v257, %v803
        %v805 = vand.u32 %v804, 4294901760
        %806 = vmatpush1.msra.mxu0 %v805
        %807 = vmatprep.subr.mxu0 0.0
        %v808 = vand.u32 %v258, 4294901760
        %v809 = vsub.f32 %v258, %v808
        %v810 = vand.u32 %v809, 4294901760
        %811 = vmatpush1.msra.mxu0 %v810
        %812 = vmatprep.subr.mxu0 0.0
        %813 = vmatpush1.msra.mxu0 0.0
        %814 = vmatprep.subr.mxu0 0.0
        %815 = vmatpush1.msra.mxu0 0.0
        %816 = vmatprep.subr.mxu0 0.0
        %817 = vmatpush1.msra.mxu0 0.0
        %818 = vmatprep.subr.mxu0 0.0
        %819 = vmatpush1.msra.mxu0 0.0
        %820 = vmatprep.subr.mxu0 0.0
        %821 = vmatpush1.msra.mxu0 0.0
        %822 = vmatprep.subr.mxu0 0.0
        %823 = vmatpush1.msra.mxu0 0.0
        %824 = vmatprep.subr.mxu0 0.0
        %825 = vmatpush1.msra.mxu0 0.0
        %826 = vmatprep.subr.mxu0 0.0
        %827 = vmatpush1.msra.mxu0 0.0
        %828 = vmatprep.subr.mxu0 0.0
        %829 = vmatpush1.msra.mxu0 0.0
        %830 = vmatprep.subr.mxu0 0.0
        %831 = vmatpush1.msra.mxu0 0.0
        %832 = vmatprep.subr.mxu0 0.0
        %833 = vmatpush1.msra.mxu0 0.0
        %834 = vmatprep.subr.mxu0 0.0
        %835 = vmatpush1.msra.mxu0 0.0
        %836 = vmatprep.subr.mxu0 0.0
        %837 = vmatpush1.msra.mxu0 0.0
        %838 = vmatprep.subr.mxu0 0.0
        %839 = vmatpush1.msra.mxu0 0.0
        %840 = vmatprep.subr.mxu0 0.0
        %841 = vmatpush1.msra.mxu0 0.0
        %842 = vmatprep.subr.mxu0 0.0
        %843 = vmatpush1.msra.mxu0 0.0
        %844 = vmatprep.mubr.f32.mxu0 0.0
        %v845 = vand.u32 %v241, 4294901760
        %846 = vmatmul.mubr.f32.gmra.mrb[0].mxu0 %v845
        %v847 = vpop.f32.mrb[0].mxu0
        %v848 = vadd.f32 %v721, %v847
        %v849 = vpop.f32.mrb[0].mxu0
        %850 = vmatprep.mubr.f32.mxu0 0.0
        %v851 = vand.u32 %v242, 4294901760
        %852 = vmatmul.mubr.f32.gmra.mrb[0].mxu0 %v851
        %v853 = vpop.f32.mrb[0].mxu0
        %v854 = vadd.f32 %v729, %v853
        %v855 = vpop.f32.mrb[0].mxu0
        %856 = vdwg.mxu0
        %857 = vmatprep.subr.mxu0 0.0
        %v858 = vand.u32 %v243, 4294901760
        %859 = vmatpush1.msra.mxu0 %v858
        %860 = vmatprep.subr.mxu0 0.0
        %v861 = vand.u32 %v244, 4294901760
        %862 = vmatpush1.msra.mxu0 %v861
        %863 = vmatprep.subr.mxu0 0.0
        %v864 = vand.u32 %v245, 4294901760
        %865 = vmatpush1.msra.mxu0 %v864
        %866 = vmatprep.subr.mxu0 0.0
        %v867 = vand.u32 %v246, 4294901760
        %868 = vmatpush1.msra.mxu0 %v867
        %869 = vmatprep.subr.mxu0 0.0
        %v870 = vand.u32 %v247, 4294901760
        %871 = vmatpush1.msra.mxu0 %v870
        %872 = vmatprep.subr.mxu0 0.0
        %v873 = vand.u32 %v248, 4294901760
        %874 = vmatpush1.msra.mxu0 %v873
        %875 = vmatprep.subr.mxu0 0.0
        %v876 = vand.u32 %v249, 4294901760
        %877 = vmatpush1.msra.mxu0 %v876
        %878 = vmatprep.subr.mxu0 0.0
        %v879 = vand.u32 %v250, 4294901760
        %880 = vmatpush1.msra.mxu0 %v879
        %881 = vmatprep.subr.mxu0 0.0
        %v882 = vand.u32 %v251, 4294901760
        %883 = vmatpush1.msra.mxu0 %v882
        %884 = vmatprep.subr.mxu0 0.0
        %v885 = vand.u32 %v252, 4294901760
        %886 = vmatpush1.msra.mxu0 %v885
        %887 = vmatprep.subr.mxu0 0.0
        %v888 = vand.u32 %v253, 4294901760
        %889 = vmatpush1.msra.mxu0 %v888
        %890 = vmatprep.subr.mxu0 0.0
        %v891 = vand.u32 %v254, 4294901760
        %892 = vmatpush1.msra.mxu0 %v891
        %893 = vmatprep.subr.mxu0 0.0
        %v894 = vand.u32 %v255, 4294901760
        %895 = vmatpush1.msra.mxu0 %v894
        %896 = vmatprep.subr.mxu0 0.0
        %v897 = vand.u32 %v256, 4294901760
        %898 = vmatpush1.msra.mxu0 %v897
        %899 = vmatprep.subr.mxu0 0.0
        %v900 = vand.u32 %v257, 4294901760
        %901 = vmatpush1.msra.mxu0 %v900
        %902 = vmatprep.subr.mxu0 0.0
        %v903 = vand.u32 %v258, 4294901760
        %904 = vmatpush1.msra.mxu0 %v903
        %905 = vmatprep.subr.mxu0 0.0
        %906 = vmatpush1.msra.mxu0 0.0
        %907 = vmatprep.subr.mxu0 0.0
        %908 = vmatpush1.msra.mxu0 0.0
        %909 = vmatprep.subr.mxu0 0.0
        %910 = vmatpush1.msra.mxu0 0.0
        %911 = vmatprep.subr.mxu0 0.0
        %912 = vmatpush1.msra.mxu0 0.0
        %913 = vmatprep.subr.mxu0 0.0
        %914 = vmatpush1.msra.mxu0 0.0
        %915 = vmatprep.subr.mxu0 0.0
        %916 = vmatpush1.msra.mxu0 0.0
        %917 = vmatprep.subr.mxu0 0.0
        %918 = vmatpush1.msra.mxu0 0.0
        %919 = vmatprep.subr.mxu0 0.0
        %920 = vmatpush1.msra.mxu0 0.0
        %921 = vmatprep.subr.mxu0 0.0
        %922 = vmatpush1.msra.mxu0 0.0
        %923 = vmatprep.subr.mxu0 0.0
        %924 = vmatpush1.msra.mxu0 0.0
        %925 = vmatprep.subr.mxu0 0.0
        %926 = vmatpush1.msra.mxu0 0.0
        %927 = vmatprep.subr.mxu0 0.0
        %928 = vmatpush1.msra.mxu0 0.0
        %929 = vmatprep.subr.mxu0 0.0
        %930 = vmatpush1.msra.mxu0 0.0
        %931 = vmatprep.subr.mxu0 0.0
        %932 = vmatpush1.msra.mxu0 0.0
        %933 = vmatprep.subr.mxu0 0.0
        %934 = vmatpush1.msra.mxu0 0.0
        %935 = vmatprep.subr.mxu0 0.0
        %936 = vmatpush1.msra.mxu0 0.0
        %937 = vmatprep.mubr.f32.mxu0 0.0
        %v938 = vand.u32 %v241, 4294901760
        %939 = vmatmul.mubr.f32.gmra.mrb[0].mxu0 %v938
        %v940 = vpop.f32.mrb[0].mxu0
        %v941 = vadd.f32 %v848, %v940
        %v942 = vpop.f32.mrb[0].mxu0
        %943 = vmatprep.mubr.f32.mxu0 0.0
        %v944 = vand.u32 %v242, 4294901760
        %945 = vmatmul.mubr.f32.gmra.mrb[0].mxu0 %v944
        %v946 = vpop.f32.mrb[0].mxu0
        %v947 = vadd.f32 %v854, %v946
        %v948 = vpop.f32.mrb[0].mxu0
        %949 = vdwg.mxu0
        %950 = vst [vmem:[%s235] sm:$0xff] %v941
        %951 = vst [vmem:[%s235 + $0x8] sm:$0xff] %v947
        %s952 = sand.u32 %s121, 1
        %s953 = scalar_lea.sflag [#allocation4], %s952
        %s954 = sand.u32 %s121, 1
        %s955 = smul.addr %s954, 16
        %s956 = scalar_lea.vmem [#allocation7], %s955
        // Predicated region
        $region41: #{tpu_custom_call.1} parent=31 // pred_check
          %p957 = pneg %p131
        $region42: #{tpu_custom_call.1} parent=31 // pred_check_branch
          %959 = sbr.rel (%p957) target = $region44
        $region43: #{tpu_custom_call.1} parent=31 // pred_region
          %s960 = smul.u32 2, %s25
          %s962 = ssub.s32 256, 256
          %963 = vsyncadd %s953, %s962
          %s964 = sadd.s32 %s26, %s960
          %s965 = smul.addr %s964, 128
          %s966 = scalar_lea.hbm %s3, %s965
          %s967 = sshll.u32 %s956, 4
          %s968 = int_to_ptr.vmem [resolvable:$true] %s967
          %973 = dma.vmem_to_hbm [thread:$0]  %s968, 256, %s966, %s953, 128, 128, 8
        $region44: #{tpu_custom_call.1} parent=31 // pred_fallthru
          _
      $region32: #{tpu_custom_call.1} parent=5 // pred_fallthru
        _
      %p974 = scmp.le.s32.totalorder 2, %s16
      // Predicated region
      $region45: #{tpu_custom_call.1} parent=5 // pred_check
        %p975 = pneg %p974
      $region46: #{tpu_custom_call.1} parent=5 // pred_check_branch
        %977 = sbr.rel (%p975) target = $region48
      $region47: #{tpu_custom_call.1} parent=5 // pred_region
        %s978 = ssub.s32 %s16, 2
        // Predicated region
        $region49: #{tpu_custom_call.1} parent=47 // pred_check
          %p979 = pneg %p137
        $region50: #{tpu_custom_call.1} parent=47 // pred_check_branch
          %981 = sbr.rel (%p979) target = $region52
        $region51: #{tpu_custom_call.1} parent=47 // pred_region
          %s982 = sand.u32 %s122, 1
          %s983 = scalar_lea.sflag [#allocation4], %s982
          %s984 = sand.u32 %s122, 1
          %s985 = smul.addr %s984, 16
          %s986 = scalar_lea.vmem [#allocation7], %s985
          %987 = dma.done %s983, 256
        $region52: #{tpu_custom_call.1} parent=47 // pred_fallthru
          _
      $region48: #{tpu_custom_call.1} parent=5 // pred_fallthru
        _
    $region6: #{tpu_custom_call.1} parent=1 // loop_footer
      %s20 = sadd.s32 1, %s16
    $region7: #{tpu_custom_call.1} parent=1 // loop_footer_branch
      %15 = sbr.rel target = $region3
    $region8: #{tpu_custom_call.1} parent=1 // loop_exit
      _
    %988 = vsyncpa [#allocation3], 1
    %s989 = scalar_lea.sflag [#allocation3], 1
    %990 = vsyncpa %s989, 1
    %991 = vsyncpa [#allocation6], 1
    %992 = vsyncpa [#allocation4], 1
    %s993 = scalar_lea.sflag [#allocation4], 1
    %994 = vsyncpa %s993, 1

</llo_original>
